<compile_context>
chip_gen: v6e
topology: v6e:2x2x1
jax: 0.10.0
libtpu: 0.0.40
codegen_flags: <defaults>
</compile_context>

<pallas_src>
import functools

import jax
import jax.numpy as jnp
from jax.experimental import pallas as pl
from jax.experimental.pallas import tpu as pltpu

LANES = 128          # fast (lane) axis width
SUBLANE_ALIGN = 16   # min sublane tile for both f32 (8) and bf16 (16) inputs


def _round_up(n, m):
    return ((n + m - 1) // m) * m


def _device_caps():
    """(max_tile_rows, num_tensorcores, vmem_limit_bytes or None) per TPU gen."""
    try:
        kind = jax.devices()[0].device_kind.lower()
    except Exception:
        kind = ""
    if "v7" in kind or "tpu7" in kind or "ironwood" in kind:
        # 4096x128 f32 = 2 MiB/input tile; with 2 TCs sharing HBM this already
        # amortizes the ~0.35 us/step overhead.  Explicit vmem limit per review.
        return 4096, 2, 32 * 1024 * 1024
    if "v6" in kind or "trillium" in kind:
        # 2 MiB/input tile; 8 MiB double-buffered -- under the 32 MiB default.
        return 4096, 1, None
    # v5e and older / unknown: stay well under the 16 MiB scoped-VMEM default.
    return 2048, 1, None


def _is_small_int(g):
    return float(g).is_integer() and 0 <= int(g) <= 6


def _int_pow(v, n):
    """v**n for a small non-negative integer n via repeated VPU multiplies."""
    if n == 0:
        return jnp.ones_like(v)
    w = v
    for _ in range(n - 1):
        w = w * v
    return w


def _reduce_rows_to_partial(loss):
    """Reduce a (tile_rows, 128) f32 tile to an (8, 128) partial (VPU adds)."""
    tr = loss.shape[0]
    tr8 = (tr // 8) * 8
    if tr8 == tr:
        if tr % 64 == 0 and tr > 64:
            # Two-level tree: independent inner chains overlap with the DMA.
            g = tr // 64
            inner = jnp.sum(loss.reshape(g, 8, 8, LANES), axis=1)
            return jnp.sum(inner, axis=0)
        return jnp.sum(loss.reshape(tr // 8, 8, LANES), axis=0)
    # Ragged row count: only happens for tiny single-block inputs.
    rowid = jax.lax.broadcasted_iota(jnp.int32, (8, LANES), 0)
    if tr8 > 0:
        main = jnp.sum(loss[:tr8].reshape(tr8 // 8, 8, LANES), axis=0)
        rem = jnp.sum(loss[tr8:], axis=0, keepdims=True)
        return main + jnp.where(rowid == 0,
                                jnp.broadcast_to(rem, (8, LANES)),
                                jnp.float32(0.0))
    rem = jnp.sum(loss, axis=0, keepdims=True)
    return jnp.where(rowid == 0, jnp.broadcast_to(rem, (8, LANES)),
                     jnp.float32(0.0))


def _bce_kernel(x_ref, y_ref, psum_ref, *, eps, gamma_pos, gamma_neg,
                binary_targets, total, needs_mask):
    # Inputs stay in their native dtype in HBM; upcast in-register only.
    x = x_ref[...].astype(jnp.float32)
    y = y_ref[...].astype(jnp.float32)

    xs_pos = x
    xs_neg = 1.0 - x

    if binary_targets:
        # One log per element (exact for hard {0,1} targets); halves EUP load.
        loss = jnp.log(jnp.maximum(jnp.where(y > 0.5, xs_pos, xs_neg), eps))
    else:
        loss = (y * jnp.log(jnp.maximum(xs_pos, eps))
                + (1.0 - y) * jnp.log(jnp.maximum(xs_neg, eps)))

    # Asymmetric focal weighting (static branch, mirrors the module).
    if gamma_neg > 0 or gamma_pos > 0:
        pt = xs_neg * y + xs_pos * (1.0 - y)
        if gamma_pos == gamma_neg and _is_small_int(gamma_pos):
            # Symmetric integer gamma: exact for any y, VPU-only.
            w = _int_pow(pt, int(gamma_pos))
        elif binary_targets and _is_small_int(gamma_pos) and _is_small_int(gamma_neg):
            # Asymmetric integer gammas with hard labels: select between two
            # repeated-multiply powers instead of exp/log on the EUP.
            w = jnp.where(y > 0.5,
                          _int_pow(pt, int(gamma_pos)),
                          _int_pow(pt, int(gamma_neg)))
        else:
            # Generic path: clamp pt away from 0 so pow -> exp(g*log(pt)) cannot
            # produce exp(0 * -inf) = NaN (matches pow(0, 0) == 1 semantics).
            one_sided_gamma = gamma_pos * y + gamma_neg * (1.0 - y)
            pt_safe = jnp.maximum(pt, jnp.float32(1e-30))
            w = jnp.power(pt_safe, one_sided_gamma)
        loss = loss * w

    if needs_mask:
        # Zero out garbage / padding in the (possibly partial) last block.
        tr = loss.shape[0]
        row = jax.lax.broadcasted_iota(jnp.int32, (tr, LANES), 0)
        lane = jax.lax.broadcasted_iota(jnp.int32, (tr, LANES), 1)
        gidx = (pl.program_id(0) * tr + row) * LANES + lane
        loss = jnp.where(gidx < total, loss, jnp.float32(0.0))

    psum_ref[...] = _reduce_rows_to_partial(loss)


def bce_loss_lzc(x, y, *, eps=1e-8, gamma_pos=0.0, gamma_neg=0.0, weight=None,
                 binary_targets=False, _max_tile_rows=None):
    """Pallas implementation of BCELoss_lzc.forward; returns a scalar f32.

    `weight` must be a static python scalar (module default: None).
    `binary_targets=True` is an opt-in fast path, exact only for hard {0,1} y.
    `_max_tile_rows` is a test-only override of the per-generation tile cap.
    """
    assert x.shape == y.shape
    total = int(x.size)
    rows = pl.cdiv(total, LANES)

    # No wrapper-side dtype casts (kernel upcasts in-register).
    xf = x.reshape(-1)
    yf = y.reshape(-1)
    lane_pad = rows * LANES - total
    if lane_pad:
        # TODO(synk): the lane-alignment pad (< 128 elems) still costs one copy
        # pass for totals not divisible by 128; values are irrelevant (masked
        # in-kernel), it only makes the (rows, 128) reshape legal.
        xf = jnp.pad(xf, (0, lane_pad))
        yf = jnp.pad(yf, (0, lane_pad))
    x2 = xf.reshape(rows, LANES)   # metadata-only reshape for contiguous inputs
    y2 = yf.reshape(rows, LANES)

    max_rows, num_tc, vmem_limit = _device_caps()
    if _max_tile_rows is not None:
        max_rows = int(_max_tile_rows)
    tile_rows = min(max_rows, _round_up(rows, SUBLANE_ALIGN))
    if num_tc > 1 and rows >= 2 * SUBLANE_ALIGN:
        # Guarantee >= 2 blocks so both v7x TensorCores get work on the
        # "parallel" grid axis.
        tile_rows = min(tile_rows,
                        _round_up(pl.cdiv(rows, num_tc), SUBLANE_ALIGN))
    if tile_rows > rows:
        tile_rows = rows           # full-dim block is always a legal shape
    num_blocks = pl.cdiv(rows, tile_rows)
    needs_mask = (num_blocks * tile_rows * LANES != total)

    kernel = functools.partial(
        _bce_kernel,
        eps=float(eps),
        gamma_pos=float(gamma_pos),
        gamma_neg=float(gamma_neg),
        binary_targets=bool(binary_targets),
        total=total,
        needs_mask=needs_mask,
    )

    compiler_kwargs = dict(dimension_semantics=("parallel",))
    if vmem_limit is not None:
        compiler_kwargs["vmem_limit_bytes"] = int(vmem_limit)

    partials = pl.pallas_call(
        kernel,
        out_shape=jax.ShapeDtypeStruct((num_blocks * 8, LANES), jnp.float32),
        grid_spec=pltpu.PrefetchScalarGridSpec(
            num_scalar_prefetch=0,
            grid=(num_blocks,),
            in_specs=[
                pl.BlockSpec((tile_rows, LANES), lambda i: (i, 0)),
                pl.BlockSpec((tile_rows, LANES), lambda i: (i, 0)),
            ],
            out_specs=pl.BlockSpec((8, LANES), lambda i: (i, 0)),
        ),
        compiler_params=pltpu.CompilerParams(**compiler_kwargs),
    )(x2, y2)

    loss_sum = jnp.sum(partials)
    if weight is not None:
        # Static scalar weight: -mean(w * loss) == -w * sum(loss) / N.
        # TODO(synk): per-element / per-class weight tensors are not supported.
        loss_sum = loss_sum * jnp.float32(weight)
    return -loss_sum / jnp.float32(total)


def _bce_loss_ref(x, y, *, eps=1e-8, gamma_pos=0.0, gamma_neg=0.0, weight=None):
    x = x.astype(jnp.float32)
    y = y.astype(jnp.float32)
    xs_pos = x
    xs_neg = 1.0 - x
    loss = y * jnp.log(jnp.maximum(xs_pos, eps)) + \
        (1.0 - y) * jnp.log(jnp.maximum(xs_neg, eps))
    if gamma_neg > 0 or gamma_pos > 0:
        pt = xs_neg * y + xs_pos * (1.0 - y)
        loss = loss * jnp.power(pt, gamma_pos * y + gamma_neg * (1.0 - y))
    if weight is not None:
        loss = loss * weight
    return -jnp.mean(loss)


if __name__ == "__main__":
    key = jax.random.PRNGKey(0)
    k = jax.random.split(key, 6)

    # Test 1: NCHW probability map, hard {0,1} targets, single-log fast path,
    # lane-aligned total (no padding, no mask).
    x1 = jax.random.uniform(k[0], (2, 4, 16, 16), dtype=jnp.float32,
                            minval=0.0, maxval=1.0)
    y1 = (jax.random.uniform(k[1], (2, 4, 16, 16)) > 0.5).astype(jnp.float32)
    out1 = jax.block_until_ready(bce_loss_lzc(x1, y1, binary_targets=True))
    ref1 = _bce_loss_ref(x1, y1)
    assert jnp.allclose(out1, ref1, rtol=1e-5, atol=1e-6), (out1, ref1)

    # Test 2: unaligned total (lane pad + ragged row count) with symmetric
    # integer focal gamma (VPU repeated-multiply path), faithful two-log form.
    x2 = jax.random.uniform(k[2], (3, 5, 7, 11), dtype=jnp.float32,
                            minval=0.01, maxval=0.99)
    y2 = (jax.random.uniform(k[3], (3, 5, 7, 11)) > 0.5).astype(jnp.float32)
    out2 = jax.block_until_ready(
        bce_loss_lzc(x2, y2, gamma_pos=2.0, gamma_neg=2.0))
    ref2 = _bce_loss_ref(x2, y2, gamma_pos=2.0, gamma_neg=2.0)
    assert jnp.allclose(out2, ref2, rtol=1e-4, atol=1e-6), (out2, ref2)

    # Test 3: multi-block grid + in-kernel tail masking + two-level reduction +
    # asymmetric integer gammas (select path) + scalar weight.
    x3 = jax.random.uniform(k[4], (2, 8, 48, 48), dtype=jnp.float32,
                            minval=0.01, maxval=0.99)
    y3 = (jax.random.uniform(k[5], (2, 8, 48, 48)) > 0.5).astype(jnp.float32)
    out3 = jax.block_until_ready(
        bce_loss_lzc(x3, y3, gamma_pos=1.0, gamma_neg=3.0, weight=0.5,
                     binary_targets=True, _max_tile_rows=128))
    ref3 = _bce_loss_ref(x3, y3, gamma_pos=1.0, gamma_neg=3.0, weight=0.5)
    assert jnp.allclose(out3, ref3, rtol=1e-4, atol=1e-6), (out3, ref3)

    print("KERNEL_OK")
</pallas_src>

<mosaic_0001>
module attributes {stable_mosaic.version = 11 : i64} {
  func.func @_bce_kernel(%arg0: i32, %arg1: memref<16x128xf32, #tpu.memory_space<vmem>>, %arg2: memref<16x128xf32, #tpu.memory_space<vmem>>, %arg3: memref<8x128xf32, #tpu.memory_space<vmem>>) attributes {dimension_semantics = [#tpu.dimension_semantics<parallel>], iteration_bounds = array<i64: 1>, scalar_prefetch = 0 : i64, scratch_operands = 0 : i64, tpu.core_type = #tpu.core_type<tc>, window_params = [{transform_indices = @transform_0, window_bounds = array<i64: 16, 128>}, {transform_indices = @transform_1, window_bounds = array<i64: 16, 128>}, {transform_indices = @transform_2, window_bounds = array<i64: 8, 128>}]} {
    %c0 = arith.constant 0 : index
    %c0_0 = arith.constant 0 : index
    %0 = vector.load %arg1[%c0, %c0_0] : memref<16x128xf32, #tpu.memory_space<vmem>>, vector<16x128xf32>
    %c0_1 = arith.constant 0 : index
    %c0_2 = arith.constant 0 : index
    %1 = vector.load %arg2[%c0_1, %c0_2] : memref<16x128xf32, #tpu.memory_space<vmem>>, vector<16x128xf32>
    %cst = arith.constant 1.000000e+00 : f32
    %2 = vector.broadcast %cst : f32 to vector<16x128xf32>
    %3 = arith.subf %2, %0 : vector<16x128xf32>
    %cst_3 = arith.constant 5.000000e-01 : f32
    %4 = vector.broadcast %cst_3 : f32 to vector<16x128xf32>
    %5 = arith.cmpf ogt, %1, %4 : vector<16x128xf32>
    %6 = arith.select %5, %0, %3 : vector<16x128xi1>, vector<16x128xf32>
    %cst_4 = arith.constant 9.99999993E-9 : f32
    %7 = vector.broadcast %cst_4 : f32 to vector<16x128xf32>
    %8 = arith.maximumf %6, %7 : vector<16x128xf32>
    %9 = math.log %8 : vector<16x128xf32>
    %10 = vector.shape_cast %9 : vector<16x128xf32> to vector<2x8x128xf32>
    %cst_5 = arith.constant dense<0.000000e+00> : vector<8x128xf32>
    %11 = vector.multi_reduction <add>, %10, %cst_5 [0] : vector<2x8x128xf32> to vector<8x128xf32>
    %c0_6 = arith.constant 0 : index
    %c0_7 = arith.constant 0 : index
    %12 = vector.load %arg3[%c0_6, %c0_7] : memref<8x128xf32, #tpu.memory_space<vmem>>, vector<8x128xf32>
    tpu.vector_store %arg3[%c0_6, %c0_7], %11 {strides = array<i32>} : memref<8x128xf32, #tpu.memory_space<vmem>>, vector<8x128xf32>,
    return
  }
  func.func @transform_0(%arg0: i32) -> (i32, i32) {
    %c0_i32 = arith.constant 0 : i32
    %c0_i32_0 = arith.constant 0 : i32
    return %arg0, %c0_i32 : i32, i32
  }
  func.func @transform_1(%arg0: i32) -> (i32, i32) {
    %c0_i32 = arith.constant 0 : i32
    %c0_i32_0 = arith.constant 0 : i32
    return %arg0, %c0_i32 : i32, i32
  }
  func.func @transform_2(%arg0: i32) -> (i32, i32) {
    %c0_i32 = arith.constant 0 : i32
    %c0_i32_0 = arith.constant 0 : i32
    return %arg0, %c0_i32 : i32, i32
  }
}

</mosaic_0001>

<llo_original>
// kernel: tpu_custom_call.1
$region0: #{tpu_custom_call.1}
  #allocation0 [shape = 'u32[]', space=smem, size = 0x4, offset = 0x4, fixed_abs, tag = 'smem constant byte address 0x4 - core index']
  #allocation1 [shape = 'u32[144,128]{1,0:T(1,128)}', space=vmem, size = 0x12000, scoped, tag = 'internal scratch']
  %s0 = inlined_call_operand.hbm [shape: f32[16,128], index: 0, kind: input, shape index: {}]
  %s1 = inlined_call_operand.hbm [shape: f32[16,128], index: 1, kind: input, shape index: {}]
  %s2 = inlined_call_operand.hbm [shape: f32[8,128], index: 2, kind: output, shape index: {}]
  %s3 = sld [smem:[#allocation0]]
  $region26: #{tpu_custom_call.1} parent=0
    _
  %s5 = ssub.s32 1, %s3
  %s6 = scalar_select 0, %s5, %s3
  $region1: #{tpu_custom_call.1} parent=0
    #allocation2 [shape = 'u8[8192]{0}', space=vmem, size = 0x2000, scoped, tag = 'input window, operand 0, single buffered']
    #allocation3 [shape = 's32[1]{0}', space=sflag, size = 0x4, scoped, tag = 'scoped memory for tpu_custom_call.1']
    #allocation4 [shape = 's32[1]{0}', space=sflag, size = 0x4, scoped, tag = 'scoped memory for tpu_custom_call.1']
    #allocation5 [shape = 'u8[8192]{0}', space=vmem, size = 0x2000, scoped, tag = 'input window, operand 1, single buffered']
    #allocation6 [shape = 's32[1]{0}', space=sflag, size = 0x4, scoped, tag = 'scoped memory for tpu_custom_call.1']
    #allocation7 [shape = 'u8[4096]{0}', space=vmem, size = 0x1000, scoped, tag = 'output window, operand 0, single buffered']
    %7 = vsyncpa [#allocation3], 0
    %8 = vsyncpa [#allocation6], 0
    %9 = vsyncpa [#allocation4], 0
    // Predicated region
    $region2: #{tpu_custom_call.1} parent=1 // pred_check
      _
    $region3: #{tpu_custom_call.1} parent=1 // pred_check_branch
      %11 = sbr.rel (0) target = $region5
    $region4: #{tpu_custom_call.1} parent=1 // pred_region
      %s13 = ssub.s32 256, 256
      %14 = vsyncadd [#allocation3], %s13
      %s15 = sshll.u32 [#allocation2], 4
      %s16 = int_to_ptr.vmem [resolvable:$true] %s15
      %21 = dma.hbm_to_vmem [thread:$0]  %s0, 256, %s16, [#allocation3], 128, 128, 8
    $region5: #{tpu_custom_call.1} parent=1 // pred_fallthru
      _
    // Predicated region
    $region6: #{tpu_custom_call.1} parent=1 // pred_check
      _
    $region7: #{tpu_custom_call.1} parent=1 // pred_check_branch
      %23 = sbr.rel (0) target = $region9
    $region8: #{tpu_custom_call.1} parent=1 // pred_region
      %s25 = ssub.s32 256, 256
      %26 = vsyncadd [#allocation6], %s25
      %s27 = sshll.u32 [#allocation5], 4
      %s28 = int_to_ptr.vmem [resolvable:$true] %s27
      %33 = dma.hbm_to_vmem [thread:$0]  %s1, 256, %s28, [#allocation6], 128, 128, 8
    $region9: #{tpu_custom_call.1} parent=1 // pred_fallthru
      _
    // Predicated region
    $region10: #{tpu_custom_call.1} parent=1 // pred_check
      _
    $region11: #{tpu_custom_call.1} parent=1 // pred_check_branch
      %35 = sbr.rel (0) target = $region13
    $region12: #{tpu_custom_call.1} parent=1 // pred_region
      %36 = dma.done [#allocation3], 256
    $region13: #{tpu_custom_call.1} parent=1 // pred_fallthru
      _
    // Predicated region
    $region14: #{tpu_custom_call.1} parent=1 // pred_check
      _
    $region15: #{tpu_custom_call.1} parent=1 // pred_check_branch
      %38 = sbr.rel (0) target = $region17
    $region16: #{tpu_custom_call.1} parent=1 // pred_region
      %39 = dma.done [#allocation6], 256
    $region17: #{tpu_custom_call.1} parent=1 // pred_fallthru
      _
    %v40 = vld [vmem:[#allocation2] sm:$0xff]
    %v41 = vld [vmem:[#allocation2 + $0x8] sm:$0xff]
    %v42 = vld [vmem:[#allocation5] sm:$0xff]
    %v43 = vld [vmem:[#allocation5 + $0x8] sm:$0xff]
    %v44 = vsub.f32 1.0, %v40
    %v45 = vsub.f32 1.0, %v41
    %vm46 = vcmp.gt.f32.partialorder %v42, 0.5
    %vm47 = vcmp.gt.f32.partialorder %v43, 0.5
    %v48 = vsel %vm46, %v40, %v44
    %v49 = vsel %vm47, %v41, %v45
    %v50 = vmax.f32 %v48, 1e-08
    %v51 = vmax.f32 %v49, 1e-08
    %v52 = vlog2.pop %v50
    %v53 = vmul.f32 %v52, 0.6931472
    %v54 = vlog2.pop %v51
    %v55 = vmul.f32 %v54, 0.6931472
    %v56 = vadd.f32 %v53, %v55
    %57 = vst [vmem:[#allocation7] sm:$0xff] %v56
    // Predicated region
    $region18: #{tpu_custom_call.1} parent=1 // pred_check
      _
    $region19: #{tpu_custom_call.1} parent=1 // pred_check_branch
      %59 = sbr.rel (0) target = $region21
    $region20: #{tpu_custom_call.1} parent=1 // pred_region
      %s61 = ssub.s32 128, 128
      %62 = vsyncadd [#allocation4], %s61
      %s64 = sshll.u32 [#allocation7], 4
      %s65 = int_to_ptr.vmem [resolvable:$true] %s64
      %67 = dma.vmem_to_hbm [thread:$0]  %s65, 128, %s2, [#allocation4]
    $region21: #{tpu_custom_call.1} parent=1 // pred_fallthru
      _
    // Predicated region
    $region22: #{tpu_custom_call.1} parent=1 // pred_check
      _
    $region23: #{tpu_custom_call.1} parent=1 // pred_check_branch
      %69 = sbr.rel (0) target = $region25
    $region24: #{tpu_custom_call.1} parent=1 // pred_region
      %70 = dma.done [#allocation4], 128
    $region25: #{tpu_custom_call.1} parent=1 // pred_fallthru
      _
    %71 = vsyncpa [#allocation3], 1
    %72 = vsyncpa [#allocation6], 1
    %73 = vsyncpa [#allocation4], 1

</llo_original>
